<compile_context>
chip_gen: v6e
topology: v6e:2x2x1
jax: 0.10.0
libtpu: 0.0.40
codegen_flags: <defaults>
</compile_context>

<pallas_src>
import jax
import jax.numpy as jnp
from jax.experimental import pallas as pl
from jax.experimental.pallas import tpu as pltpu


# ~2 MiB for the widest f32 tile (x tile / hidden activations) per grid step.
_TARGET_TILE_BYTES = 2 * 1024 * 1024


# ---------------------------------------------------------------------------
# Fused MLP kernel: relu(relu(x @ W1 + b1) @ W2 + b2) @ W3 + b3
# All weights + one batch tile of activations stay VMEM-resident.
# ---------------------------------------------------------------------------
def _mlp_kernel(x_ref, w1_ref, b1_ref, w2_ref, b2_ref, w3_ref, b3_ref, o_ref):
    # fc1 -> ReLU (f32 accumulation on the MXU)
    h = jnp.dot(x_ref[...], w1_ref[...], preferred_element_type=jnp.float32)
    h = jnp.maximum(h + b1_ref[...], 0.0)
    # fc2 -> ReLU (cast back to streaming dtype -> MXU fast path when bf16)
    h = jnp.dot(h.astype(w2_ref.dtype), w2_ref[...],
                preferred_element_type=jnp.float32)
    h = jnp.maximum(h + b2_ref[...], 0.0)
    # fc3 (logits), f32 out
    out = jnp.dot(h.astype(w3_ref.dtype), w3_ref[...],
                  preferred_element_type=jnp.float32)
    o_ref[...] = out + b3_ref[...]


def task_discriminator_forward(x, params, *, tb=None, stream_dtype=None):
    """Pallas implementation of TaskDiscriminator.forward.

    x:       (B, seq_len, action_dim) float (any (B, ...) flattening to seq_len*action_dim)
    params:  [(w1, b1), (w2, b2), (w3, b3)] in PyTorch nn.Linear layout (out, in)/(out,)
    returns: logits (B, 1) float32
    """
    B = x.shape[0]
    x2 = x.reshape(B, -1)

    # Stream x in its native dtype (no forced f32 upcast => no extra HBM pass
    # for bf16 callers). stream_dtype overrides, e.g. jnp.bfloat16.
    if stream_dtype is None:
        if (jnp.issubdtype(x2.dtype, jnp.floating)
                and jnp.dtype(x2.dtype).itemsize <= 4):
            stream_dtype = x2.dtype
        else:
            stream_dtype = jnp.float32
    x2 = x2.astype(stream_dtype)
    D = x2.shape[1]

    (w1, b1), (w2, b2), (w3, b3) = params
    H = w1.shape[0]

    # One-time layout prep outside the hot path: (out, in) -> (in, out), weights
    # in the streaming dtype; biases stay f32 and are added post-accumulation.
    w1t = jnp.transpose(w1).astype(stream_dtype)
    w2t = jnp.transpose(w2).astype(stream_dtype)
    w3t = jnp.transpose(w3).astype(stream_dtype)
    b1r = b1.reshape(1, H).astype(jnp.float32)
    b2r = b2.reshape(1, H).astype(jnp.float32)
    b3r = b3.reshape(1, 1).astype(jnp.float32)

    # --- batch tiling --------------------------------------------------------
    # Sublane granularity of the tiled block: 8 rows for 4-byte, 16 for 2-byte.
    sub = 16 if jnp.dtype(stream_dtype).itemsize < 4 else 8
    if tb is None:
        # Size so the widest f32 tile is ~2 MiB: per-step overhead negligible,
        # VMEM (incl. double-buffering) bounded on all generations, and any
        # B > tb gives >= 2 grid steps for v7x megacore sharding.
        tb = _TARGET_TILE_BYTES // (max(D, H, 1) * 4)
    if tb >= B:
        tb = B                              # single full block (full-dim exemption)
    else:
        tb = max(sub, (tb // sub) * sub)    # keep the tiled block (8/16,128)-legal
    grid = (pl.cdiv(B, tb),)                # ragged B: Pallas clips the boundary block

    return pl.pallas_call(
        _mlp_kernel,
        out_shape=jax.ShapeDtypeStruct((B, 1), jnp.float32),
        grid=grid,
        in_specs=[
            pl.BlockSpec((tb, D), lambda i: (i, 0)),   # batch tile of flattened actions
            pl.BlockSpec((D, H), lambda i: (0, 0)),    # fc1 weight (VMEM-resident, fetched once)
            pl.BlockSpec((1, H), lambda i: (0, 0)),    # fc1 bias
            pl.BlockSpec((H, H), lambda i: (0, 0)),    # fc2 weight
            pl.BlockSpec((1, H), lambda i: (0, 0)),    # fc2 bias
            pl.BlockSpec((H, 1), lambda i: (0, 0)),    # fc3 weight
            pl.BlockSpec((1, 1), lambda i: (0, 0)),    # fc3 bias
        ],
        out_specs=pl.BlockSpec((tb, 1), lambda i: (i, 0)),
        compiler_params=pltpu.CompilerParams(
            dimension_semantics=("parallel",)),        # independent batch tiles -> v7x megacore
    )(x2, w1t, b1r, w2t, b2r, w3t, b3r)


# ---------------------------------------------------------------------------
# Pure-JAX reference (mirrors the PyTorch module, full f32)
# ---------------------------------------------------------------------------
def task_discriminator_reference(x, params):
    (w1, b1), (w2, b2), (w3, b3) = params
    h = x.reshape(x.shape[0], -1).astype(jnp.float32)
    h = jnp.maximum(h @ w1.T + b1, 0.0)
    h = jnp.maximum(h @ w2.T + b2, 0.0)
    return h @ w3.T + b3


# ---------------------------------------------------------------------------
# Deterministic parameter construction (PyTorch nn.Linear layouts)
# ---------------------------------------------------------------------------
def make_params(key, action_dim, seq_len, hidden_dim):
    d_in = action_dim * seq_len
    dims = [(hidden_dim, d_in), (hidden_dim, hidden_dim), (1, hidden_dim)]
    params = []
    for dout, din in dims:
        key, kw, kb = jax.random.split(key, 3)
        bound = 1.0 / (din ** 0.5)
        w = jax.random.uniform(kw, (dout, din), jnp.float32, -bound, bound)
        b = jax.random.uniform(kb, (dout,), jnp.float32, -bound, bound)
        params.append((w, b))
    return params


if __name__ == "__main__":
    # action_dim=4, seq_len=8, hidden_dim=32, batch=2  -> input (2, 8, 4)
    batch, action_dim, seq_len, hidden_dim = 2, 4, 8, 32

    key = jax.random.PRNGKey(0)
    key, kx = jax.random.split(key)
    x = jax.random.normal(kx, (batch, seq_len, action_dim), jnp.float32)
    params = make_params(key, action_dim, seq_len, hidden_dim)

    # 1) Tiny batch, f32 streaming path (single grid step).
    logits = jax.block_until_ready(task_discriminator_forward(x, params))
    ref = jax.block_until_ready(task_discriminator_reference(x, params))
    assert logits.shape == (batch, 1), logits.shape
    assert jnp.allclose(logits, ref, rtol=2e-2, atol=2e-2), \
        float(jnp.max(jnp.abs(logits - ref)))

    # 2) bf16 streaming path (halves HBM traffic for the only large stream).
    logits_bf16 = jax.block_until_ready(
        task_discriminator_forward(x.astype(jnp.bfloat16), params))
    assert logits_bf16.shape == (batch, 1), logits_bf16.shape
    assert jnp.allclose(logits_bf16, ref, rtol=5e-2, atol=5e-2), \
        float(jnp.max(jnp.abs(logits_bf16 - ref)))

    # 3) Tiled, non-divisible batch path (grid > 1, boundary block clipped).
    key, kx2 = jax.random.split(key)
    xb = jax.random.normal(kx2, (300, seq_len, action_dim), jnp.float32)
    logits_b = jax.block_until_ready(
        task_discriminator_forward(xb, params, tb=128))
    ref_b = jax.block_until_ready(task_discriminator_reference(xb, params))
    assert logits_b.shape == (300, 1), logits_b.shape
    assert jnp.allclose(logits_b, ref_b, rtol=2e-2, atol=2e-2), \
        float(jnp.max(jnp.abs(logits_b - ref_b)))

    print("KERNEL_OK")
</pallas_src>

<mosaic_0001>
module attributes {stable_mosaic.version = 11 : i64} {
  func.func @_mlp_kernel(%arg0: i32, %arg1: memref<2x32xf32, #tpu.memory_space<vmem>>, %arg2: memref<32x32xf32, #tpu.memory_space<vmem>>, %arg3: memref<1x32xf32, #tpu.memory_space<vmem>>, %arg4: memref<32x32xf32, #tpu.memory_space<vmem>>, %arg5: memref<1x32xf32, #tpu.memory_space<vmem>>, %arg6: memref<32x1xf32, #tpu.memory_space<vmem>>, %arg7: memref<1x1xf32, #tpu.memory_space<vmem>>, %arg8: memref<2x1xf32, #tpu.memory_space<vmem>>) attributes {dimension_semantics = [#tpu.dimension_semantics<parallel>], iteration_bounds = array<i64: 1>, scalar_prefetch = 0 : i64, scratch_operands = 0 : i64, tpu.core_type = #tpu.core_type<tc>, window_params = [{transform_indices = @transform_0, window_bounds = array<i64: 2, 32>}, {pipeline_mode = #tpu.pipeline_mode<synchronous>, transform_indices = @transform_1, window_bounds = array<i64: 32, 32>}, {pipeline_mode = #tpu.pipeline_mode<synchronous>, transform_indices = @transform_2, window_bounds = array<i64: 1, 32>}, {pipeline_mode = #tpu.pipeline_mode<synchronous>, transform_indices = @transform_3, window_bounds = array<i64: 32, 32>}, {pipeline_mode = #tpu.pipeline_mode<synchronous>, transform_indices = @transform_4, window_bounds = array<i64: 1, 32>}, {pipeline_mode = #tpu.pipeline_mode<synchronous>, transform_indices = @transform_5, window_bounds = array<i64: 32, 1>}, {pipeline_mode = #tpu.pipeline_mode<synchronous>, transform_indices = @transform_6, window_bounds = array<i64: 1, 1>}, {transform_indices = @transform_7, window_bounds = array<i64: 2, 1>}]} {
    %c0 = arith.constant 0 : index
    %c0_0 = arith.constant 0 : index
    %0 = vector.load %arg1[%c0, %c0_0] : memref<2x32xf32, #tpu.memory_space<vmem>>, vector<2x32xf32>
    %c0_1 = arith.constant 0 : index
    %c0_2 = arith.constant 0 : index
    %1 = vector.load %arg2[%c0_1, %c0_2] : memref<32x32xf32, #tpu.memory_space<vmem>>, vector<32x32xf32>
    %cst = arith.constant dense<0.000000e+00> : vector<2x32xf32>
    %2 = tpu.matmul %0, %1, %cst {dimension_numbers = #tpu.dot_dimension_numbers<[1], [0], [0], [1], [0, 0, 1, 1], [], []>} : vector<2x32xf32>, vector<32x32xf32>, vector<2x32xf32> -> vector<2x32xf32>
    %c0_3 = arith.constant 0 : index
    %c0_4 = arith.constant 0 : index
    %3 = vector.load %arg3[%c0_3, %c0_4] : memref<1x32xf32, #tpu.memory_space<vmem>>, vector<1x32xf32>
    %4 = vector.broadcast %3 : vector<1x32xf32> to vector<2x32xf32>
    %5 = arith.addf %2, %4 : vector<2x32xf32>
    %cst_5 = arith.constant 0.000000e+00 : f32
    %6 = vector.broadcast %cst_5 : f32 to vector<2x32xf32>
    %7 = arith.maximumf %5, %6 : vector<2x32xf32>
    %c0_6 = arith.constant 0 : index
    %c0_7 = arith.constant 0 : index
    %8 = vector.load %arg4[%c0_6, %c0_7] : memref<32x32xf32, #tpu.memory_space<vmem>>, vector<32x32xf32>
    %cst_8 = arith.constant dense<0.000000e+00> : vector<2x32xf32>
    %9 = tpu.matmul %7, %8, %cst_8 {dimension_numbers = #tpu.dot_dimension_numbers<[1], [0], [0], [1], [0, 0, 1, 1], [], []>} : vector<2x32xf32>, vector<32x32xf32>, vector<2x32xf32> -> vector<2x32xf32>
    %c0_9 = arith.constant 0 : index
    %c0_10 = arith.constant 0 : index
    %10 = vector.load %arg5[%c0_9, %c0_10] : memref<1x32xf32, #tpu.memory_space<vmem>>, vector<1x32xf32>
    %11 = vector.broadcast %10 : vector<1x32xf32> to vector<2x32xf32>
    %12 = arith.addf %9, %11 : vector<2x32xf32>
    %cst_11 = arith.constant 0.000000e+00 : f32
    %13 = vector.broadcast %cst_11 : f32 to vector<2x32xf32>
    %14 = arith.maximumf %12, %13 : vector<2x32xf32>
    %c0_12 = arith.constant 0 : index
    %c0_13 = arith.constant 0 : index
    %15 = vector.load %arg6[%c0_12, %c0_13] : memref<32x1xf32, #tpu.memory_space<vmem>>, vector<32x1xf32>
    %cst_14 = arith.constant dense<0.000000e+00> : vector<2x1xf32>
    %16 = tpu.matmul %14, %15, %cst_14 {dimension_numbers = #tpu.dot_dimension_numbers<[1], [0], [0], [1], [0, 0, 1, 1], [], []>} : vector<2x32xf32>, vector<32x1xf32>, vector<2x1xf32> -> vector<2x1xf32>
    %c0_15 = arith.constant 0 : index
    %c0_16 = arith.constant 0 : index
    %17 = vector.load %arg7[%c0_15, %c0_16] : memref<1x1xf32, #tpu.memory_space<vmem>>, vector<1x1xf32>
    %18 = vector.broadcast %17 : vector<1x1xf32> to vector<2x1xf32>
    %19 = arith.addf %16, %18 : vector<2x1xf32>
    %c0_17 = arith.constant 0 : index
    %c0_18 = arith.constant 0 : index
    %20 = vector.load %arg8[%c0_17, %c0_18] : memref<2x1xf32, #tpu.memory_space<vmem>>, vector<2x1xf32>
    tpu.vector_store %arg8[%c0_17, %c0_18], %19 {strides = array<i32>} : memref<2x1xf32, #tpu.memory_space<vmem>>, vector<2x1xf32>,
    return
  }
  func.func @transform_0(%arg0: i32) -> (i32, i32) {
    %c0_i32 = arith.constant 0 : i32
    %c0_i32_0 = arith.constant 0 : i32
    return %arg0, %c0_i32 : i32, i32
  }
  func.func @transform_1(%arg0: i32) -> (i32, i32) {
    %c0_i32 = arith.constant 0 : i32
    %c0_i32_0 = arith.constant 0 : i32
    %c0_i32_1 = arith.constant 0 : i32
    return %c0_i32, %c0_i32_0 : i32, i32
  }
  func.func @transform_2(%arg0: i32) -> (i32, i32) {
    %c0_i32 = arith.constant 0 : i32
    %c0_i32_0 = arith.constant 0 : i32
    %c0_i32_1 = arith.constant 0 : i32
    return %c0_i32, %c0_i32_0 : i32, i32
  }
  func.func @transform_3(%arg0: i32) -> (i32, i32) {
    %c0_i32 = arith.constant 0 : i32
    %c0_i32_0 = arith.constant 0 : i32
    %c0_i32_1 = arith.constant 0 : i32
    return %c0_i32, %c0_i32_0 : i32, i32
  }
  func.func @transform_4(%arg0: i32) -> (i32, i32) {
    %c0_i32 = arith.constant 0 : i32
    %c0_i32_0 = arith.constant 0 : i32
    %c0_i32_1 = arith.constant 0 : i32
    return %c0_i32, %c0_i32_0 : i32, i32
  }
  func.func @transform_5(%arg0: i32) -> (i32, i32) {
    %c0_i32 = arith.constant 0 : i32
    %c0_i32_0 = arith.constant 0 : i32
    %c0_i32_1 = arith.constant 0 : i32
    return %c0_i32, %c0_i32_0 : i32, i32
  }
  func.func @transform_6(%arg0: i32) -> (i32, i32) {
    %c0_i32 = arith.constant 0 : i32
    %c0_i32_0 = arith.constant 0 : i32
    %c0_i32_1 = arith.constant 0 : i32
    return %c0_i32, %c0_i32_0 : i32, i32
  }
  func.func @transform_7(%arg0: i32) -> (i32, i32) {
    %c0_i32 = arith.constant 0 : i32
    %c0_i32_0 = arith.constant 0 : i32
    return %arg0, %c0_i32 : i32, i32
  }
}

</mosaic_0001>

<llo_original>
// kernel: tpu_custom_call.1
$region0: #{tpu_custom_call.1}
  #allocation0 [shape = 'u32[]', space=smem, size = 0x4, offset = 0x4, fixed_abs, tag = 'smem constant byte address 0x4 - core index']
  #allocation1 [shape = 'u32[144,128]{1,0:T(1,128)}', space=vmem, size = 0x12000, scoped, tag = 'internal scratch']
  #allocation2 [shape = 'f32[1,1]{1,0:T(1,128)S(1)}', space=vmem, size = 0x200, scoped, tag = 'scoped memory for tpu_custom_call.1']
  %s0 = inlined_call_operand.vmem [shape: f32[2,32], index: 0, kind: input, shape index: {}]
  %s1 = inlined_call_operand.vmem [shape: f32[32,32], index: 1, kind: input, shape index: {}]
  %s2 = inlined_call_operand.vmem [shape: f32[1,32], index: 2, kind: input, shape index: {}]
  %s3 = inlined_call_operand.hbm [shape: f32[32,32], index: 3, kind: input, shape index: {}]
  %s4 = inlined_call_operand.vmem [shape: f32[1,32], index: 4, kind: input, shape index: {}]
  %s5 = inlined_call_operand.vmem [shape: f32[32,1], index: 5, kind: input, shape index: {}]
  %s6 = inlined_call_operand.<no memory space> [shape: f32[1,1], index: 6, kind: input, shape index: {}]
  %s7 = inlined_call_operand.vmem [shape: f32[2,1], index: 7, kind: output, shape index: {}]
  %s8 = sld [smem:[#allocation0]]
  $region42: #{tpu_custom_call.1} parent=0
    _
  %s10 = ssub.s32 1, %s8
  %s11 = scalar_select 0, %s10, %s8
  %v12 = vstv %s6
  %13 = vst [vmem:[#allocation2] sm:$0x1] %v12
  $region1: #{tpu_custom_call.1} parent=0
    #allocation3 [shape = 'u8[16384]{0}', space=vmem, size = 0x4000, scoped, tag = 'input window, operand 3, single buffered']
    #allocation4 [shape = 's32[1]{0}', space=sflag, size = 0x4, scoped, tag = 'scoped memory for tpu_custom_call.1']
    %14 = vsyncpa [#allocation4], 0
    // Predicated region
    $region2: #{tpu_custom_call.1} parent=1 // pred_check
      _
    $region3: #{tpu_custom_call.1} parent=1 // pred_check_branch
      %16 = sbr.rel (0) target = $region5
    $region4: #{tpu_custom_call.1} parent=1 // pred_region
      _
    $region5: #{tpu_custom_call.1} parent=1 // pred_fallthru
      _
    // Predicated region
    $region6: #{tpu_custom_call.1} parent=1 // pred_check
      _
    $region7: #{tpu_custom_call.1} parent=1 // pred_check_branch
      %18 = sbr.rel (0) target = $region9
    $region8: #{tpu_custom_call.1} parent=1 // pred_region
      _
    $region9: #{tpu_custom_call.1} parent=1 // pred_fallthru
      _
    // Predicated region
    $region10: #{tpu_custom_call.1} parent=1 // pred_check
      _
    $region11: #{tpu_custom_call.1} parent=1 // pred_check_branch
      %20 = sbr.rel (0) target = $region13
    $region12: #{tpu_custom_call.1} parent=1 // pred_region
      _
    $region13: #{tpu_custom_call.1} parent=1 // pred_fallthru
      _
    // Predicated region
    $region14: #{tpu_custom_call.1} parent=1 // pred_check
      _
    $region15: #{tpu_custom_call.1} parent=1 // pred_check_branch
      %22 = sbr.rel (0) target = $region17
    $region16: #{tpu_custom_call.1} parent=1 // pred_region
      %s24 = ssub.s32 512, 512
      %25 = vsyncadd [#allocation4], %s24
      %s26 = sshll.u32 [#allocation3], 4
      %s27 = int_to_ptr.vmem [resolvable:$true] %s26
      %32 = dma.hbm_to_vmem [thread:$0]  %s3, 512, %s27, [#allocation4], 128, 128, 8
    $region17: #{tpu_custom_call.1} parent=1 // pred_fallthru
      _
    // Predicated region
    $region18: #{tpu_custom_call.1} parent=1 // pred_check
      _
    $region19: #{tpu_custom_call.1} parent=1 // pred_check_branch
      %34 = sbr.rel (0) target = $region21
    $region20: #{tpu_custom_call.1} parent=1 // pred_region
      _
    $region21: #{tpu_custom_call.1} parent=1 // pred_fallthru
      _
    // Predicated region
    $region22: #{tpu_custom_call.1} parent=1 // pred_check
      _
    $region23: #{tpu_custom_call.1} parent=1 // pred_check_branch
      %36 = sbr.rel (0) target = $region25
    $region24: #{tpu_custom_call.1} parent=1 // pred_region
      _
    $region25: #{tpu_custom_call.1} parent=1 // pred_fallthru
      _
    // Predicated region
    $region26: #{tpu_custom_call.1} parent=1 // pred_check
      _
    $region27: #{tpu_custom_call.1} parent=1 // pred_check_branch
      %38 = sbr.rel (0) target = $region29
    $region28: #{tpu_custom_call.1} parent=1 // pred_region
      _
    $region29: #{tpu_custom_call.1} parent=1 // pred_fallthru
      _
    // Predicated region
    $region30: #{tpu_custom_call.1} parent=1 // pred_check
      _
    $region31: #{tpu_custom_call.1} parent=1 // pred_check_branch
      %40 = sbr.rel (0) target = $region33
    $region32: #{tpu_custom_call.1} parent=1 // pred_region
      %41 = dma.done [#allocation4], 512
    $region33: #{tpu_custom_call.1} parent=1 // pred_fallthru
      _
    %v42 = vld [vmem:[%s0] sm:$0x3]
    %v43 = vld [vmem:[%s1] sm:$0xff]
    %v44 = vld [vmem:[%s1 + $0x8] sm:$0xff]
    %v45 = vld [vmem:[%s1 + $0x10] sm:$0xff]
    %v46 = vld [vmem:[%s1 + $0x18] sm:$0xff]
    %v47 = vld [vmem:[%s2] sm:$0x1]
    %v49 = vlaneseq
    %v50 = vshrl.u32 %v49, 7
    %v51 = vsub.s32 0, %v50
    %v52 = vrot.slane %v47, %v51
    %vm54 = vcmask 261120
    %v56 = vsel %vm54, %v42, 0
    %58 = vmatprep.subr.mxu0 0.0
    %59 = vmatpush1.msra.mxu0 0.0
    %60 = vmatprep.subr.mxu0 0.0
    %61 = vmatpush1.msra.mxu0 0.0
    %62 = vmatprep.subr.mxu0 0.0
    %63 = vmatpush1.msra.mxu0 0.0
    %64 = vmatprep.subr.mxu0 0.0
    %65 = vmatpush1.msra.mxu0 0.0
    %66 = vmatprep.subr.mxu0 0.0
    %67 = vmatpush1.msra.mxu0 0.0
    %68 = vmatprep.subr.mxu0 0.0
    %69 = vmatpush1.msra.mxu0 0.0
    %70 = vmatprep.subr.mxu0 0.0
    %71 = vmatpush1.msra.mxu0 0.0
    %72 = vmatprep.subr.mxu0 0.0
    %73 = vmatpush1.msra.mxu0 0.0
    %74 = vmatprep.subr.mxu0 0.0
    %75 = vmatpush1.msra.mxu0 0.0
    %76 = vmatprep.subr.mxu0 0.0
    %77 = vmatpush1.msra.mxu0 0.0
    %78 = vmatprep.subr.mxu0 0.0
    %79 = vmatpush1.msra.mxu0 0.0
    %80 = vmatprep.subr.mxu0 0.0
    %81 = vmatpush1.msra.mxu0 0.0
    %82 = vmatprep.subr.mxu0 0.0
    %83 = vmatpush1.msra.mxu0 %v46
    %84 = vmatprep.subr.mxu0 0.0
    %85 = vmatpush1.msra.mxu0 %v45
    %86 = vmatprep.subr.mxu0 0.0
    %87 = vmatpush1.msra.mxu0 %v44
    %88 = vmatprep.subr.mxu0 0.0
    %89 = vmatpush1.msra.mxu0 %v43
    %90 = vmatprep.subr.mxu0 0.0
    %91 = vmatpush2.msra.mxu0 0.0
    %92 = vmatprep.subr.mxu0 0.0
    %93 = vmatpush2.msra.mxu0 0.0
    %94 = vmatprep.subr.mxu0 0.0
    %95 = vmatpush2.msra.mxu0 0.0
    %96 = vmatprep.subr.mxu0 0.0
    %97 = vmatpush2.msra.mxu0 0.0
    %98 = vmatprep.subr.mxu0 0.0
    %99 = vmatpush2.msra.mxu0 0.0
    %100 = vmatprep.subr.mxu0 0.0
    %101 = vmatpush2.msra.mxu0 0.0
    %102 = vmatprep.subr.mxu0 0.0
    %103 = vmatpush2.msra.mxu0 0.0
    %104 = vmatprep.subr.mxu0 0.0
    %105 = vmatpush2.msra.mxu0 0.0
    %106 = vmatprep.subr.mxu0 0.0
    %107 = vmatpush2.msra.mxu0 0.0
    %108 = vmatprep.subr.mxu0 0.0
    %109 = vmatpush2.msra.mxu0 0.0
    %110 = vmatprep.subr.mxu0 0.0
    %111 = vmatpush2.msra.mxu0 0.0
    %112 = vmatprep.subr.mxu0 0.0
    %113 = vmatpush2.msra.mxu0 0.0
    %114 = vmatprep.subr.mxu0 0.0
    %115 = vmatpush2.msra.mxu0 0.0
    %116 = vmatprep.subr.mxu0 0.0
    %117 = vmatpush2.msra.mxu0 0.0
    %118 = vmatprep.subr.mxu0 0.0
    %119 = vmatpush2.msra.mxu0 0.0
    %120 = vmatprep.subr.mxu0 0.0
    %121 = vmatpush2.msra.mxu0 0.0
    %122 = vmatprep.mubr.f32.mxu0 0.0
    %123 = vmatmul.mubr.f32.gmra.mxu0 %v56
    %v124 = vpop.f32.mrf.mxu0
    %v125 = vadd.f32 %v52, %v124
    %v126 = vpop.f32.mrf.mxu0
    %127 = vdwg.mxu0
    %v128 = vmax.f32 %v125, 0.0
    %v129 = vld [vmem:[#allocation3] sm:$0xff]
    %v130 = vld [vmem:[#allocation3 + $0x8] sm:$0xff]
    %v131 = vld [vmem:[#allocation3 + $0x10] sm:$0xff]
    %v132 = vld [vmem:[#allocation3 + $0x18] sm:$0xff]
    %v133 = vld [vmem:[%s4] sm:$0x1]
    %v135 = vlaneseq
    %v136 = vshrl.u32 %v135, 7
    %v137 = vsub.s32 0, %v136
    %v138 = vrot.slane %v133, %v137
    %v141 = vsel %vm54, %v128, 0
    %143 = vmatprep.subr.mxu0 0.0
    %144 = vmatpush1.msra.mxu0 0.0
    %145 = vmatprep.subr.mxu0 0.0
    %146 = vmatpush1.msra.mxu0 0.0
    %147 = vmatprep.subr.mxu0 0.0
    %148 = vmatpush1.msra.mxu0 0.0
    %149 = vmatprep.subr.mxu0 0.0
    %150 = vmatpush1.msra.mxu0 0.0
    %151 = vmatprep.subr.mxu0 0.0
    %152 = vmatpush1.msra.mxu0 0.0
    %153 = vmatprep.subr.mxu0 0.0
    %154 = vmatpush1.msra.mxu0 0.0
    %155 = vmatprep.subr.mxu0 0.0
    %156 = vmatpush1.msra.mxu0 0.0
    %157 = vmatprep.subr.mxu0 0.0
    %158 = vmatpush1.msra.mxu0 0.0
    %159 = vmatprep.subr.mxu0 0.0
    %160 = vmatpush1.msra.mxu0 0.0
    %161 = vmatprep.subr.mxu0 0.0
    %162 = vmatpush1.msra.mxu0 0.0
    %163 = vmatprep.subr.mxu0 0.0
    %164 = vmatpush1.msra.mxu0 0.0
    %165 = vmatprep.subr.mxu0 0.0
    %166 = vmatpush1.msra.mxu0 0.0
    %167 = vmatprep.subr.mxu0 0.0
    %168 = vmatpush1.msra.mxu0 %v132
    %169 = vmatprep.subr.mxu0 0.0
    %170 = vmatpush1.msra.mxu0 %v131
    %171 = vmatprep.subr.mxu0 0.0
    %172 = vmatpush1.msra.mxu0 %v130
    %173 = vmatprep.subr.mxu0 0.0
    %174 = vmatpush1.msra.mxu0 %v129
    %175 = vmatprep.subr.mxu0 0.0
    %176 = vmatpush2.msra.mxu0 0.0
    %177 = vmatprep.subr.mxu0 0.0
    %178 = vmatpush2.msra.mxu0 0.0
    %179 = vmatprep.subr.mxu0 0.0
    %180 = vmatpush2.msra.mxu0 0.0
    %181 = vmatprep.subr.mxu0 0.0
    %182 = vmatpush2.msra.mxu0 0.0
    %183 = vmatprep.subr.mxu0 0.0
    %184 = vmatpush2.msra.mxu0 0.0
    %185 = vmatprep.subr.mxu0 0.0
    %186 = vmatpush2.msra.mxu0 0.0
    %187 = vmatprep.subr.mxu0 0.0
    %188 = vmatpush2.msra.mxu0 0.0
    %189 = vmatprep.subr.mxu0 0.0
    %190 = vmatpush2.msra.mxu0 0.0
    %191 = vmatprep.subr.mxu0 0.0
    %192 = vmatpush2.msra.mxu0 0.0
    %193 = vmatprep.subr.mxu0 0.0
    %194 = vmatpush2.msra.mxu0 0.0
    %195 = vmatprep.subr.mxu0 0.0
    %196 = vmatpush2.msra.mxu0 0.0
    %197 = vmatprep.subr.mxu0 0.0
    %198 = vmatpush2.msra.mxu0 0.0
    %199 = vmatprep.subr.mxu0 0.0
    %200 = vmatpush2.msra.mxu0 0.0
    %201 = vmatprep.subr.mxu0 0.0
    %202 = vmatpush2.msra.mxu0 0.0
    %203 = vmatprep.subr.mxu0 0.0
    %204 = vmatpush2.msra.mxu0 0.0
    %205 = vmatprep.subr.mxu0 0.0
    %206 = vmatpush2.msra.mxu0 0.0
    %207 = vmatprep.mubr.f32.mxu0 0.0
    %208 = vmatmul.mubr.f32.gmra.mxu0 %v141
    %v209 = vpop.f32.mrf.mxu0
    %v210 = vadd.f32 %v138, %v209
    %v211 = vpop.f32.mrf.mxu0
    %212 = vdwg.mxu0
    %v213 = vmax.f32 %v210, 0.0
    %v214 = vld [vmem:[%s5] sm:$0xff]
    %v215 = vld [vmem:[%s5 + $0x8] sm:$0xff]
    %v216 = vld [vmem:[%s5 + $0x10] sm:$0xff]
    %v217 = vld [vmem:[%s5 + $0x18] sm:$0xff]
    %v218 = vld [vmem:[#allocation2] sm:$0x1]
    %v220 = vlaneseq
    %v221 = vshrl.u32 %v220, 7
    %v222 = vsub.s32 0, %v221
    %v223 = vrot.slane %v218, %v222
    %v226 = vsel %vm54, %v213, 0
    %228 = vmatprep.subr.mxu0 0.0
    %229 = vmatpush1.msra.mxu0 0.0
    %230 = vmatprep.subr.mxu0 0.0
    %231 = vmatpush1.msra.mxu0 0.0
    %232 = vmatprep.subr.mxu0 0.0
    %233 = vmatpush1.msra.mxu0 0.0
    %234 = vmatprep.subr.mxu0 0.0
    %235 = vmatpush1.msra.mxu0 0.0
    %236 = vmatprep.subr.mxu0 0.0
    %237 = vmatpush1.msra.mxu0 0.0
    %238 = vmatprep.subr.mxu0 0.0
    %239 = vmatpush1.msra.mxu0 0.0
    %240 = vmatprep.subr.mxu0 0.0
    %241 = vmatpush1.msra.mxu0 0.0
    %242 = vmatprep.subr.mxu0 0.0
    %243 = vmatpush1.msra.mxu0 0.0
    %244 = vmatprep.subr.mxu0 0.0
    %245 = vmatpush1.msra.mxu0 0.0
    %246 = vmatprep.subr.mxu0 0.0
    %247 = vmatpush1.msra.mxu0 0.0
    %248 = vmatprep.subr.mxu0 0.0
    %249 = vmatpush1.msra.mxu0 0.0
    %250 = vmatprep.subr.mxu0 0.0
    %251 = vmatpush1.msra.mxu0 0.0
    %252 = vmatprep.subr.mxu0 0.0
    %253 = vmatpush1.msra.mxu0 %v217
    %254 = vmatprep.subr.mxu0 0.0
    %255 = vmatpush1.msra.mxu0 %v216
    %256 = vmatprep.subr.mxu0 0.0
    %257 = vmatpush1.msra.mxu0 %v215
    %258 = vmatprep.subr.mxu0 0.0
    %259 = vmatpush1.msra.mxu0 %v214
    %260 = vmatprep.subr.mxu0 0.0
    %261 = vmatpush2.msra.mxu0 0.0
    %262 = vmatprep.subr.mxu0 0.0
    %263 = vmatpush2.msra.mxu0 0.0
    %264 = vmatprep.subr.mxu0 0.0
    %265 = vmatpush2.msra.mxu0 0.0
    %266 = vmatprep.subr.mxu0 0.0
    %267 = vmatpush2.msra.mxu0 0.0
    %268 = vmatprep.subr.mxu0 0.0
    %269 = vmatpush2.msra.mxu0 0.0
    %270 = vmatprep.subr.mxu0 0.0
    %271 = vmatpush2.msra.mxu0 0.0
    %272 = vmatprep.subr.mxu0 0.0
    %273 = vmatpush2.msra.mxu0 0.0
    %274 = vmatprep.subr.mxu0 0.0
    %275 = vmatpush2.msra.mxu0 0.0
    %276 = vmatprep.subr.mxu0 0.0
    %277 = vmatpush2.msra.mxu0 0.0
    %278 = vmatprep.subr.mxu0 0.0
    %279 = vmatpush2.msra.mxu0 0.0
    %280 = vmatprep.subr.mxu0 0.0
    %281 = vmatpush2.msra.mxu0 0.0
    %282 = vmatprep.subr.mxu0 0.0
    %283 = vmatpush2.msra.mxu0 0.0
    %284 = vmatprep.subr.mxu0 0.0
    %285 = vmatpush2.msra.mxu0 0.0
    %286 = vmatprep.subr.mxu0 0.0
    %287 = vmatpush2.msra.mxu0 0.0
    %288 = vmatprep.subr.mxu0 0.0
    %289 = vmatpush2.msra.mxu0 0.0
    %290 = vmatprep.subr.mxu0 0.0
    %291 = vmatpush2.msra.mxu0 0.0
    %292 = vmatprep.mubr.f32.mxu0 0.0
    %293 = vmatmul.mubr.f32.gmra.mxu0 %v226
    %v294 = vpop.f32.mrf.mxu0
    %v295 = vadd.f32 %v223, %v294
    %v296 = vpop.f32.mrf.mxu0
    %297 = vdwg.mxu0
    %vm298 = vcmask 1024
    %299 = vst.msk [vmem:[%s7] sm:$0x3] %vm298, %v295
    // Predicated region
    $region34: #{tpu_custom_call.1} parent=1 // pred_check
      _
    $region35: #{tpu_custom_call.1} parent=1 // pred_check_branch
      %301 = sbr.rel (0) target = $region37
    $region36: #{tpu_custom_call.1} parent=1 // pred_region
      _
    $region37: #{tpu_custom_call.1} parent=1 // pred_fallthru
      _
    // Predicated region
    $region38: #{tpu_custom_call.1} parent=1 // pred_check
      _
    $region39: #{tpu_custom_call.1} parent=1 // pred_check_branch
      %303 = sbr.rel (0) target = $region41
    $region40: #{tpu_custom_call.1} parent=1 // pred_region
      _
    $region41: #{tpu_custom_call.1} parent=1 // pred_fallthru
      _
    %304 = vsyncpa [#allocation4], 1

</llo_original>
